<compile_context>
chip_gen: v7x
topology: tpu7x:2x2x1
jax: 0.10.0
libtpu: 0.0.40
codegen_flags: <defaults>
</compile_context>

<pallas_src>
import jax
import jax.numpy as jnp
from jax import lax
from jax.experimental import pallas as pl
from jax.experimental.pallas import tpu as pltpu

_EPS = 1e-12  # torch.nn.functional.normalize default eps


def _similarity_kernel(x_ref, y_ref, o_ref):
    x = x_ref[...]                      # (tn, D), native dtype
    y = y_ref[...]                      # (tm, D), native dtype

    # Raw Gram matrix on the MXU: contract the last dim of both operands
    # directly (no yn.T materialization), accumulate in f32.
    acc = lax.dot_general(
        x, y,
        dimension_numbers=(((1,), (1,)), ((), ())),
        preferred_element_type=jnp.float32,
    )                                   # (tn, tm) f32

    # Row-wise inverse L2 norms (EUP rsqrt). Clamping the *squared* norm at
    # eps**2 is equivalent to torch's norm.clamp_min(eps) before dividing.
    xf = x.astype(jnp.float32)
    yf = y.astype(jnp.float32)
    inv_nx = lax.rsqrt(
        jnp.maximum(jnp.sum(xf * xf, axis=-1, keepdims=True), _EPS * _EPS)
    )                                   # (tn, 1)
    inv_ny = lax.rsqrt(
        jnp.maximum(jnp.sum(yf * yf, axis=-1), _EPS * _EPS)
    )                                   # (tm,)

    # Epilogue: scale accumulator by the outer product of inverse norms.
    o_ref[...] = (acc * inv_nx * inv_ny[None, :]).astype(o_ref.dtype)


def _pick_tile(dim: int, candidates=(512, 256, 128)) -> int:
    """Largest MXU/lane-aligned tile that evenly divides `dim`, else full dim."""
    for t in candidates:
        if dim >= t and dim % t == 0:
            return t
    return dim


def similarity(x: jax.Array, y: jax.Array) -> jax.Array:
    """Pallas implementation of Similarity.forward(x, y) = norm(x) @ norm(y).T."""
    assert x.ndim == 2 and y.ndim == 2 and x.shape[1] == y.shape[1]
    n, d = x.shape
    m, _ = y.shape

    tn = _pick_tile(n)
    tm = _pick_tile(m)
    grid = (n // tn, m // tm)

    return pl.pallas_call(
        _similarity_kernel,
        out_shape=jax.ShapeDtypeStruct((n, m), x.dtype),
        grid_spec=pl.GridSpec(
            grid=grid,
            in_specs=[
                pl.BlockSpec((tn, d), lambda i, j: (i, 0)),
                pl.BlockSpec((tm, d), lambda i, j: (j, 0)),
            ],
            out_specs=pl.BlockSpec((tn, tm), lambda i, j: (i, j)),
        ),
        compiler_params=pltpu.CompilerParams(
            dimension_semantics=("parallel", "parallel"),
        ),
    )(x, y)


def _ref(x, y):
    xn = x / jnp.maximum(jnp.linalg.norm(x, axis=1, keepdims=True), _EPS)
    yn = y / jnp.maximum(jnp.linalg.norm(y, axis=1, keepdims=True), _EPS)
    return xn @ yn.T


if __name__ == "__main__":
    key = jax.random.PRNGKey(0)
    kx, ky = jax.random.split(key)

    # Small shapes consistent with the module: x (seq=8, hidden=32), y (seq=8, hidden=32)
    x = jax.random.normal(kx, (8, 32), dtype=jnp.float32)
    y = jax.random.normal(ky, (8, 32), dtype=jnp.float32)

    out = similarity(x, y)
    jax.block_until_ready(out)
    assert out.shape == (8, 8)
    assert jnp.allclose(out, _ref(x, y), atol=1e-4, rtol=1e-4)

    # Second check that exercises the tiled (multi-grid-point) path.
    kx2, ky2 = jax.random.split(jax.random.PRNGKey(1))
    x2 = jax.random.normal(kx2, (256, 128), dtype=jnp.float32)
    y2 = jax.random.normal(ky2, (256, 128), dtype=jnp.float32)
    out2 = similarity(x2, y2)
    jax.block_until_ready(out2)
    assert out2.shape == (256, 256)
    assert jnp.allclose(out2, _ref(x2, y2), atol=1e-4, rtol=1e-4)

    print("KERNEL_OK")
</pallas_src>

<mosaic_0001>
module attributes {stable_mosaic.version = 11 : i64} {
  func.func @_similarity_kernel(%arg0: i32, %arg1: i32, %arg2: memref<8x32xf32, #tpu.memory_space<vmem>>, %arg3: memref<8x32xf32, #tpu.memory_space<vmem>>, %arg4: memref<8x8xf32, #tpu.memory_space<vmem>>) attributes {dimension_semantics = [#tpu.dimension_semantics<parallel>, #tpu.dimension_semantics<parallel>], iteration_bounds = array<i64: 1, 1>, scalar_prefetch = 0 : i64, scratch_operands = 0 : i64, tpu.core_type = #tpu.core_type<tc>, window_params = [{transform_indices = @transform_0, window_bounds = array<i64: 8, 32>}, {transform_indices = @transform_1, window_bounds = array<i64: 8, 32>}, {transform_indices = @transform_2, window_bounds = array<i64: 8, 8>}]} {
    %c0 = arith.constant 0 : index
    %c0_0 = arith.constant 0 : index
    %0 = vector.load %arg2[%c0, %c0_0] : memref<8x32xf32, #tpu.memory_space<vmem>>, vector<8x32xf32>
    %c0_1 = arith.constant 0 : index
    %c0_2 = arith.constant 0 : index
    %1 = vector.load %arg3[%c0_1, %c0_2] : memref<8x32xf32, #tpu.memory_space<vmem>>, vector<8x32xf32>
    %cst = arith.constant dense<0.000000e+00> : vector<8x8xf32>
    %2 = tpu.matmul %0, %1, %cst {dimension_numbers = #tpu.dot_dimension_numbers<[1], [1], [0], [0], [0, 0, 1, 0], [], []>} : vector<8x32xf32>, vector<8x32xf32>, vector<8x8xf32> -> vector<8x8xf32>
    %3 = arith.mulf %0, %0 : vector<8x32xf32>
    %cst_3 = arith.constant dense<0.000000e+00> : vector<8xf32>
    %4 = vector.multi_reduction <add>, %3, %cst_3 [1] : vector<8x32xf32> to vector<8xf32>
    %5 = vector.shape_cast %4 : vector<8xf32> to vector<8x1xf32>
    %cst_4 = arith.constant 1.000000e-24 : f32
    %6 = vector.broadcast %cst_4 : f32 to vector<8x1xf32>
    %7 = arith.maximumf %5, %6 : vector<8x1xf32>
    %8 = math.rsqrt %7 : vector<8x1xf32>
    %9 = arith.mulf %1, %1 : vector<8x32xf32>
    %cst_5 = arith.constant dense<0.000000e+00> : vector<8xf32>
    %10 = vector.multi_reduction <add>, %9, %cst_5 [1] : vector<8x32xf32> to vector<8xf32>
    %cst_6 = arith.constant 1.000000e-24 : f32
    %11 = vector.broadcast %cst_6 : f32 to vector<8xf32>
    %12 = arith.maximumf %10, %11 : vector<8xf32>
    %13 = math.rsqrt %12 : vector<8xf32>
    %14 = vector.broadcast %8 : vector<8x1xf32> to vector<8x8xf32>
    %15 = arith.mulf %2, %14 : vector<8x8xf32>
    %16 = vector.shape_cast %13 : vector<8xf32> to vector<1x8xf32>
    %17 = vector.broadcast %16 : vector<1x8xf32> to vector<8x8xf32>
    %18 = arith.mulf %15, %17 : vector<8x8xf32>
    %c0_7 = arith.constant 0 : index
    %c0_8 = arith.constant 0 : index
    %19 = vector.load %arg4[%c0_7, %c0_8] : memref<8x8xf32, #tpu.memory_space<vmem>>, vector<8x8xf32>
    tpu.vector_store %arg4[%c0_7, %c0_8], %18 {strides = array<i32>} : memref<8x8xf32, #tpu.memory_space<vmem>>, vector<8x8xf32>,
    return
  }
  func.func @transform_0(%arg0: i32, %arg1: i32) -> (i32, i32) {
    %c0_i32 = arith.constant 0 : i32
    %c0_i32_0 = arith.constant 0 : i32
    return %arg0, %c0_i32 : i32, i32
  }
  func.func @transform_1(%arg0: i32, %arg1: i32) -> (i32, i32) {
    %c0_i32 = arith.constant 0 : i32
    %c0_i32_0 = arith.constant 0 : i32
    return %arg1, %c0_i32 : i32, i32
  }
  func.func @transform_2(%arg0: i32, %arg1: i32) -> (i32, i32) {
    %c0_i32 = arith.constant 0 : i32
    return %arg0, %arg1 : i32, i32
  }
}

</mosaic_0001>

<llo_original>
// kernel: tpu_custom_call.1
$region0: #{tpu_custom_call.1}
  #allocation0 [shape = 'u32[]', space=smem, size = 0x4, offset = 0x4, fixed_abs, tag = 'smem constant byte address 0x4 - core index']
  #allocation1 [shape = 'u32[144,128]{1,0:T(1,128)}', space=vmem, size = 0x12000, scoped, tag = 'internal scratch']
  %s0 = inlined_call_operand.hbm [shape: f32[8,32], index: 0, kind: input, shape index: {}]
  %s1 = inlined_call_operand.hbm [shape: f32[8,32], index: 1, kind: input, shape index: {}]
  %s2 = inlined_call_operand.hbm [shape: f32[8,8], index: 2, kind: output, shape index: {}]
  %s3 = sld [smem:[#allocation0]]
  $region26: #{tpu_custom_call.1} parent=0
    _
  %s5 = ssub.s32 1, %s3
  %s6 = scalar_select 0, %s5, %s3
  $region1: #{tpu_custom_call.1} parent=0
    #allocation2 [shape = 'u8[4096]{0}', space=vmem, size = 0x1000, scoped, tag = 'input window, operand 0, single buffered']
    #allocation3 [shape = 's32[1]{0}', space=sflag, size = 0x4, scoped, tag = 'scoped memory for tpu_custom_call.1']
    #allocation4 [shape = 's32[1]{0}', space=sflag, size = 0x4, scoped, tag = 'scoped memory for tpu_custom_call.1']
    #allocation5 [shape = 'u8[4096]{0}', space=vmem, size = 0x1000, scoped, tag = 'input window, operand 1, single buffered']
    #allocation6 [shape = 's32[1]{0}', space=sflag, size = 0x4, scoped, tag = 'scoped memory for tpu_custom_call.1']
    #allocation7 [shape = 'u8[4096]{0}', space=vmem, size = 0x1000, scoped, tag = 'output window, operand 0, single buffered']
    %7 = vsyncpa [#allocation3], 0
    %8 = vsyncpa [#allocation6], 0
    %9 = vsyncpa [#allocation4], 0
    // Predicated region
    $region2: #{tpu_custom_call.1} parent=1 // pred_check
      _
    $region3: #{tpu_custom_call.1} parent=1 // pred_check_branch
      %11 = sbr.rel (0) target = $region5
    $region4: #{tpu_custom_call.1} parent=1 // pred_region
      %s13 = ssub.s32 128, 128
      %14 = vsyncadd [#allocation3], %s13
      %s16 = sshll.u32 [#allocation2], 4
      %s17 = int_to_ptr.vmem [resolvable:$true] %s16
      %19 = dma.hbm_to_vmem [thread:$0]  %s0, 128, %s17, [#allocation3]
    $region5: #{tpu_custom_call.1} parent=1 // pred_fallthru
      _
    // Predicated region
    $region6: #{tpu_custom_call.1} parent=1 // pred_check
      _
    $region7: #{tpu_custom_call.1} parent=1 // pred_check_branch
      %21 = sbr.rel (0) target = $region9
    $region8: #{tpu_custom_call.1} parent=1 // pred_region
      %s23 = ssub.s32 128, 128
      %24 = vsyncadd [#allocation6], %s23
      %s26 = sshll.u32 [#allocation5], 4
      %s27 = int_to_ptr.vmem [resolvable:$true] %s26
      %29 = dma.hbm_to_vmem [thread:$0]  %s1, 128, %s27, [#allocation6]
    $region9: #{tpu_custom_call.1} parent=1 // pred_fallthru
      _
    // Predicated region
    $region10: #{tpu_custom_call.1} parent=1 // pred_check
      _
    $region11: #{tpu_custom_call.1} parent=1 // pred_check_branch
      %31 = sbr.rel (0) target = $region13
    $region12: #{tpu_custom_call.1} parent=1 // pred_region
      %32 = dma.done [#allocation3], 128
    $region13: #{tpu_custom_call.1} parent=1 // pred_fallthru
      _
    // Predicated region
    $region14: #{tpu_custom_call.1} parent=1 // pred_check
      _
    $region15: #{tpu_custom_call.1} parent=1 // pred_check_branch
      %34 = sbr.rel (0) target = $region17
    $region16: #{tpu_custom_call.1} parent=1 // pred_region
      %35 = dma.done [#allocation6], 128
    $region17: #{tpu_custom_call.1} parent=1 // pred_fallthru
      _
    %v36 = vld [vmem:[#allocation2] sm:$0xff]
    %v37 = vld [vmem:[#allocation5] sm:$0xff]
    %vm38 = vcmask 261120
    %v40 = vsel %vm38, %v36, 0
    %v43 = vsel %vm38, %v37, 0
    %45 = vmatprep.subr.mxu0 0.0
    %46 = vmatpush1.xpose.msra.mxu0 %v43
    %47 = vmatprep.subr.mxu0 0.0
    %48 = vmatpush1.xpose.msra.mxu0 0.0
    %49 = vmatprep.subr.mxu0 0.0
    %50 = vmatpush1.xpose.msra.mxu0 0.0
    %51 = vmatprep.subr.mxu0 0.0
    %52 = vmatpush1.xpose.msra.mxu0 0.0
    %53 = vmatprep.subr.mxu0 0.0
    %54 = vmatpush1.xpose.msra.mxu0 0.0
    %55 = vmatprep.subr.mxu0 0.0
    %56 = vmatpush1.xpose.msra.mxu0 0.0
    %57 = vmatprep.subr.mxu0 0.0
    %58 = vmatpush1.xpose.msra.mxu0 0.0
    %59 = vmatprep.subr.mxu0 0.0
    %60 = vmatpush1.xpose.msra.mxu0 0.0
    %61 = vmatprep.subr.mxu0 0.0
    %62 = vmatpush1.xpose.msra.mxu0 0.0
    %63 = vmatprep.subr.mxu0 0.0
    %64 = vmatpush1.xpose.msra.mxu0 0.0
    %65 = vmatprep.subr.mxu0 0.0
    %66 = vmatpush1.xpose.msra.mxu0 0.0
    %67 = vmatprep.subr.mxu0 0.0
    %68 = vmatpush1.xpose.msra.mxu0 0.0
    %69 = vmatprep.subr.mxu0 0.0
    %70 = vmatpush1.xpose.msra.mxu0 0.0
    %71 = vmatprep.subr.mxu0 0.0
    %72 = vmatpush1.xpose.msra.mxu0 0.0
    %73 = vmatprep.subr.mxu0 0.0
    %74 = vmatpush1.xpose.msra.mxu0 0.0
    %75 = vmatprep.subr.mxu0 0.0
    %76 = vmatpush1.xpose.msra.mxu0 0.0
    %77 = vmatprep.subr.mxu0 0.0
    %78 = vmatpush1.xpose.msra.mxu0 0.0
    %79 = vmatprep.subr.mxu0 0.0
    %80 = vmatpush1.xpose.msra.mxu0 0.0
    %81 = vmatprep.subr.mxu0 0.0
    %82 = vmatpush1.xpose.msra.mxu0 0.0
    %83 = vmatprep.subr.mxu0 0.0
    %84 = vmatpush1.xpose.msra.mxu0 0.0
    %85 = vmatprep.subr.mxu0 0.0
    %86 = vmatpush1.xpose.msra.mxu0 0.0
    %87 = vmatprep.subr.mxu0 0.0
    %88 = vmatpush1.xpose.msra.mxu0 0.0
    %89 = vmatprep.subr.mxu0 0.0
    %90 = vmatpush1.xpose.msra.mxu0 0.0
    %91 = vmatprep.subr.mxu0 0.0
    %92 = vmatpush1.xpose.msra.mxu0 0.0
    %93 = vmatprep.subr.mxu0 0.0
    %94 = vmatpush1.xpose.msra.mxu0 0.0
    %95 = vmatprep.subr.mxu0 0.0
    %96 = vmatpush1.xpose.msra.mxu0 0.0
    %97 = vmatprep.subr.mxu0 0.0
    %98 = vmatpush1.xpose.msra.mxu0 0.0
    %99 = vmatprep.subr.mxu0 0.0
    %100 = vmatpush1.xpose.msra.mxu0 0.0
    %101 = vmatprep.subr.mxu0 0.0
    %102 = vmatpush1.xpose.msra.mxu0 0.0
    %103 = vmatprep.subr.mxu0 0.0
    %104 = vmatpush1.xpose.msra.mxu0 0.0
    %105 = vmatprep.subr.mxu0 0.0
    %106 = vmatpush1.xpose.msra.mxu0 0.0
    %107 = vmatprep.subr.mxu0 0.0
    %108 = vmatpush1.xpose.msra.mxu0 0.0
    %109 = vmatprep.mubr.f32.mxu0 0.0
    %110 = vmatmul.mubr.f32.gmra.mrb[0].mxu0 %v40
    %v111 = vpop.f32.mrb[0].mxu0
    %v112 = vadd.f32 0.0, %v111
    %v113 = vpop.f32.mrb[0].mxu0
    %114 = vdwg.mxu0
    %v115 = vmul.f32 %v36, %v36
    %v116 = vsel %vm38, %v115, 0.0
    %117 = vadd.xlane.f32.xlu0 %v116
    %v118 = vpop.xlane.xlu0 %117
    %v119 = vmax.f32 %v118, 1e-24
    %v120 = vrsqrt.pop %v119
    %v121 = vmul.f32 %v37, %v37
    %v122 = vsel %vm38, %v121, 0.0
    %123 = vadd.xlane.f32.xlu0 %v122
    %v124 = vpop.xlane.xlu0 %123
    %v125 = vmax.f32 %v124, 1e-24
    %v126 = vrsqrt.pop %v125
    %v127 = vmul.f32 %v112, %v120
    %v129 = vlaneseq
    %v130 = vand.u32 %v129, 127
    %v131 = vlaneseq
    %v132 = vshrl.u32 %v131, 7
    %v133 = vsub.s32 %v130, %v132
    %v134 = vrot.slane %v126, %v133
    %vm135 = vcmask 1042434
    %v136 = vsel %vm135, %v134, %v134
    %vm137 = vcmask 1043459
    %v138 = vsel %vm137, %v134, %v136
    %vm139 = vcmask 1044484
    %v140 = vsel %vm139, %v134, %v138
    %vm141 = vcmask 1045509
    %v142 = vsel %vm141, %v134, %v140
    %vm143 = vcmask 1046534
    %v144 = vsel %vm143, %v134, %v142
    %vm145 = vcmask 1047559
    %v146 = vsel %vm145, %v134, %v144
    %v148 = vmul.f32 %v127, %v146
    %vm149 = vcmask 64512
    %150 = vst.msk [vmem:[#allocation7] sm:$0xff] %vm149, %v148
    // Predicated region
    $region18: #{tpu_custom_call.1} parent=1 // pred_check
      _
    $region19: #{tpu_custom_call.1} parent=1 // pred_check_branch
      %152 = sbr.rel (0) target = $region21
    $region20: #{tpu_custom_call.1} parent=1 // pred_region
      %s154 = ssub.s32 128, 128
      %155 = vsyncadd [#allocation4], %s154
      %s157 = sshll.u32 [#allocation7], 4
      %s158 = int_to_ptr.vmem [resolvable:$true] %s157
      %160 = dma.vmem_to_hbm [thread:$0]  %s158, 128, %s2, [#allocation4]
    $region21: #{tpu_custom_call.1} parent=1 // pred_fallthru
      _
    // Predicated region
    $region22: #{tpu_custom_call.1} parent=1 // pred_check
      _
    $region23: #{tpu_custom_call.1} parent=1 // pred_check_branch
      %162 = sbr.rel (0) target = $region25
    $region24: #{tpu_custom_call.1} parent=1 // pred_region
      %163 = dma.done [#allocation4], 128
    $region25: #{tpu_custom_call.1} parent=1 // pred_fallthru
      _
    %164 = vsyncpa [#allocation3], 1
    %165 = vsyncpa [#allocation6], 1
    %166 = vsyncpa [#allocation4], 1

</llo_original>
